<compile_context>
chip_gen: v6e
topology: v6e:2x2x1
jax: 0.10.0
libtpu: 0.0.40
codegen_flags: <defaults>
</compile_context>

<pallas_src>
import functools

import jax
import jax.numpy as jnp
from jax.experimental import pallas as pl
from jax.experimental.pallas import tpu as pltpu


BN_EPS = 1e-5
LEAKY_SLOPE = 0.1
LANE = 128
SUBLANE = 8
VMEM_LIMIT_BYTES = 32 * 1024 * 1024  # safe on v5e/v6e (128 MiB) and v7x (64 MiB)


def _round_up(x, m):
    return (x + m - 1) // m * m


def _matmul_stats_kernel(p_ref, w_ref, g_ref, beta_ref, y_ref, ss_ref, *, inv_m):
    """Phase 1: tiled MXU matmul + per-channel BN statistics.

    p_ref:    (TM, K_pad)   im2col patch tile
    w_ref:    (K_pad, C_pad) weight matrix (resident across the grid)
    g_ref:    (1, C_pad)     BN gamma
    beta_ref: (1, C_pad)     BN beta
    y_ref:    (TM, C_pad)    pre-BN conv output tile
    ss_ref:   (2, C_pad)     accumulator; finalized to [scale; shift] at the last step
    """
    i = pl.program_id(0)

    @pl.when(i == 0)
    def _init():
        ss_ref[...] = jnp.zeros_like(ss_ref)

    y = jnp.dot(p_ref[...], w_ref[...], preferred_element_type=jnp.float32)
    y_ref[...] = y

    # Padded rows of patches are zero and there is no bias add, so they contribute 0 here.
    ss_ref[0:1, :] += jnp.sum(y, axis=0, keepdims=True)
    ss_ref[1:2, :] += jnp.sum(y * y, axis=0, keepdims=True)

    @pl.when(i == pl.num_programs(0) - 1)
    def _finalize():
        mean = ss_ref[0:1, :] * inv_m
        ex2 = ss_ref[1:2, :] * inv_m
        var = ex2 - mean * mean  # biased (training-mode) variance
        scale = g_ref[...] * jax.lax.rsqrt(var + BN_EPS)
        shift = beta_ref[...] - mean * scale
        ss_ref[0:1, :] = scale
        ss_ref[1:2, :] = shift


def _bn_lrelu_kernel(y_ref, ss_ref, o_ref):
    """Phase 2: lane-dense fused BN affine + LeakyReLU(0.1)."""
    scale = ss_ref[0:1, :]
    shift = ss_ref[1:2, :]
    z = y_ref[...] * scale + shift
    o_ref[...] = jnp.where(z >= 0, z, LEAKY_SLOPE * z).astype(o_ref.dtype)


def conv_block_forward(x_nchw, weight, bias, gamma, beta, *, padding, stride=1, block_m=256):
    """x_nchw: (N, C_in, H, W); weight: (C_out, C_in, KH, KW).

    `bias` is accepted for API parity with nn.Conv2d but is intentionally not added:
    training-mode BatchNorm cancels it exactly (same forward output up to fp rounding).
    """
    del bias  # cancelled by BN mean subtraction (training mode)

    N, C_in, H, W = x_nchw.shape
    C_out, _, KH, KW = weight.shape
    H_out = (H + 2 * padding - KH) // stride + 1
    W_out = (W + 2 * padding - KW) // stride + 1

    # --- glue: NCHW -> NHWC, pad, im2col (ordering per pixel: kh, kw, c_in) ---
    x = jnp.transpose(x_nchw, (0, 2, 3, 1))
    xp = jnp.pad(x, ((0, 0), (padding, padding), (padding, padding), (0, 0)))
    patch_list = []
    for i in range(KH):
        for j in range(KW):
            patch_list.append(
                xp[:, i : i + stride * H_out : stride, j : j + stride * W_out : stride, :]
            )
    patches = jnp.concatenate(patch_list, axis=-1)  # (N, H_out, W_out, KH*KW*C_in)

    M = N * H_out * W_out
    K = KH * KW * C_in

    # Pad to MXU/lane-friendly shapes.
    K_pad = _round_up(K, LANE)        # lane-aligned contraction dim
    C_pad = _round_up(C_out, LANE)    # lane-dense output channels (unmasked stores)
    tm = _round_up(min(block_m, _round_up(M, SUBLANE)), SUBLANE)
    M_pad = _round_up(M, tm)
    grid_m = M_pad // tm

    patches = patches.reshape(M, K).astype(jnp.float32)
    patches = jnp.pad(patches, ((0, M_pad - M), (0, K_pad - K)))

    w_mat = jnp.transpose(weight, (2, 3, 1, 0)).reshape(K, C_out).astype(jnp.float32)
    w_mat = jnp.pad(w_mat, ((0, K_pad - K), (0, C_pad - C_out)))

    g_row = jnp.pad(gamma.astype(jnp.float32), (0, C_pad - C_out)).reshape(1, C_pad)
    b_row = jnp.pad(beta.astype(jnp.float32), (0, C_pad - C_out)).reshape(1, C_pad)

    # ---- phase 1: tiled matmul + BN statistics (scale/shift finalized in-kernel) ----
    cost1 = pl.CostEstimate(
        flops=2 * M * K * C_out,
        transcendentals=0,
        bytes_accessed=4 * (M_pad * K_pad + K_pad * C_pad + M_pad * C_pad),
    )
    y, ss = pl.pallas_call(
        functools.partial(_matmul_stats_kernel, inv_m=1.0 / M),
        out_shape=(
            jax.ShapeDtypeStruct((M_pad, C_pad), jnp.float32),
            jax.ShapeDtypeStruct((2, C_pad), jnp.float32),
        ),
        grid=(grid_m,),
        in_specs=[
            pl.BlockSpec((tm, K_pad), lambda i: (i, 0)),      # patches: streamed over M
            pl.BlockSpec((K_pad, C_pad), lambda i: (0, 0)),   # weights: VMEM-resident
            pl.BlockSpec((1, C_pad), lambda i: (0, 0)),       # gamma
            pl.BlockSpec((1, C_pad), lambda i: (0, 0)),       # beta
        ],
        out_specs=(
            pl.BlockSpec((tm, C_pad), lambda i: (i, 0)),      # y tiles
            pl.BlockSpec((2, C_pad), lambda i: (0, 0)),       # stats -> [scale; shift]
        ),
        compiler_params=pltpu.CompilerParams(
            dimension_semantics=("arbitrary",),               # reduction over M
            vmem_limit_bytes=VMEM_LIMIT_BYTES,
        ),
        cost_estimate=cost1,
    )(patches, w_mat, g_row, b_row)

    # ---- phase 2: lane-dense normalize + LeakyReLU ----
    out = pl.pallas_call(
        _bn_lrelu_kernel,
        out_shape=jax.ShapeDtypeStruct((M_pad, C_pad), jnp.float32),
        grid=(grid_m,),
        in_specs=[
            pl.BlockSpec((tm, C_pad), lambda i: (i, 0)),
            pl.BlockSpec((2, C_pad), lambda i: (0, 0)),
        ],
        out_specs=pl.BlockSpec((tm, C_pad), lambda i: (i, 0)),
        compiler_params=pltpu.CompilerParams(
            dimension_semantics=("parallel",),                # independent M tiles (2 TCs on v7x)
            vmem_limit_bytes=VMEM_LIMIT_BYTES,
        ),
    )(y, ss)

    out = out[:M, :C_out].reshape(N, H_out, W_out, C_out)
    return jnp.transpose(out, (0, 3, 1, 2))


def reference_forward(x_nchw, weight, bias, gamma, beta, *, padding, stride=1):
    """Pure-JAX reference matching PyTorch ConvBlock (training-mode BN)."""
    y = jax.lax.conv_general_dilated(
        x_nchw.astype(jnp.float32),
        weight.astype(jnp.float32),
        window_strides=(stride, stride),
        padding=[(padding, padding), (padding, padding)],
        dimension_numbers=("NCHW", "OIHW", "NCHW"),
    )
    y = y + bias.reshape(1, -1, 1, 1)
    mean = jnp.mean(y, axis=(0, 2, 3), keepdims=True)
    var = jnp.mean((y - mean) ** 2, axis=(0, 2, 3), keepdims=True)
    yhat = (y - mean) * jax.lax.rsqrt(var + BN_EPS)
    z = yhat * gamma.reshape(1, -1, 1, 1) + beta.reshape(1, -1, 1, 1)
    return jnp.where(z >= 0, z, LEAKY_SLOPE * z)


if __name__ == "__main__":
    # Small shapes consistent with the module: batch=2, C_in=4, C_out=8, 16x16, 3x3 conv, pad=1.
    N, C_in, C_out, H, W = 2, 4, 8, 16, 16
    KH = KW = 3
    padding, stride = 1, 1

    key = jax.random.PRNGKey(0)
    kx, kw, kb = jax.random.split(key, 3)

    x = jax.random.normal(kx, (N, C_in, H, W), dtype=jnp.float32)
    fan_in = C_in * KH * KW
    weight = jax.random.uniform(
        kw, (C_out, C_in, KH, KW), minval=-1.0, maxval=1.0, dtype=jnp.float32
    ) / jnp.sqrt(fan_in)
    bias = jax.random.uniform(
        kb, (C_out,), minval=-1.0, maxval=1.0, dtype=jnp.float32
    ) / jnp.sqrt(fan_in)
    gamma = jnp.ones((C_out,), dtype=jnp.float32)   # BatchNorm2d weight init
    beta = jnp.zeros((C_out,), dtype=jnp.float32)   # BatchNorm2d bias init

    out = conv_block_forward(x, weight, bias, gamma, beta, padding=padding, stride=stride)
    out = jax.block_until_ready(out)

    ref = reference_forward(x, weight, bias, gamma, beta, padding=padding, stride=stride)
    ref = jax.block_until_ready(ref)

    assert out.shape == (N, C_out, H, W), out.shape
    assert jnp.allclose(out, ref, atol=1e-4, rtol=1e-4), float(jnp.max(jnp.abs(out - ref)))

    print("KERNEL_OK")
</pallas_src>

<mosaic_0001>
module attributes {stable_mosaic.version = 11 : i64} {
  func.func @_matmul_stats_kernel(%arg0: i32, %arg1: memref<256x128xf32, #tpu.memory_space<vmem>>, %arg2: memref<128x128xf32, #tpu.memory_space<vmem>>, %arg3: memref<1x128xf32, #tpu.memory_space<vmem>>, %arg4: memref<1x128xf32, #tpu.memory_space<vmem>>, %arg5: memref<256x128xf32, #tpu.memory_space<vmem>>, %arg6: memref<2x128xf32, #tpu.memory_space<vmem>>) attributes {dimension_semantics = [#tpu.dimension_semantics<arbitrary>], iteration_bounds = array<i64: 2>, scalar_prefetch = 0 : i64, scratch_operands = 0 : i64, tpu.core_type = #tpu.core_type<tc>, window_params = [{transform_indices = @transform_0, window_bounds = array<i64: 256, 128>}, {pipeline_mode = #tpu.pipeline_mode<synchronous>, transform_indices = @transform_1, window_bounds = array<i64: 128, 128>}, {pipeline_mode = #tpu.pipeline_mode<synchronous>, transform_indices = @transform_2, window_bounds = array<i64: 1, 128>}, {pipeline_mode = #tpu.pipeline_mode<synchronous>, transform_indices = @transform_3, window_bounds = array<i64: 1, 128>}, {transform_indices = @transform_4, window_bounds = array<i64: 256, 128>}, {pipeline_mode = #tpu.pipeline_mode<synchronous>, transform_indices = @transform_5, window_bounds = array<i64: 2, 128>}]} {
    %c0_i32 = arith.constant 0 : i32
    %0 = arith.cmpi eq, %arg0, %c0_i32 : i32
    %1 = arith.extui %0 : i1 to i32
    %c0_i32_0 = arith.constant 0 : i32
    %2 = arith.cmpi ne, %1, %c0_i32_0 : i32
    scf.if %2 {
      %cst_16 = arith.constant 0.000000e+00 : f32
      %21 = vector.broadcast %cst_16 : f32 to vector<2x128xf32>
      %c0_17 = arith.constant 0 : index
      %c0_18 = arith.constant 0 : index
      %22 = vector.load %arg6[%c0_17, %c0_18] : memref<2x128xf32, #tpu.memory_space<vmem>>, vector<2x128xf32>
      tpu.vector_store %arg6[%c0_17, %c0_18], %21 {strides = array<i32>} : memref<2x128xf32, #tpu.memory_space<vmem>>, vector<2x128xf32>,
    } else {
    }
    %c0 = arith.constant 0 : index
    %c0_1 = arith.constant 0 : index
    %3 = vector.load %arg1[%c0, %c0_1] : memref<256x128xf32, #tpu.memory_space<vmem>>, vector<256x128xf32>
    %c0_2 = arith.constant 0 : index
    %c0_3 = arith.constant 0 : index
    %4 = vector.load %arg2[%c0_2, %c0_3] : memref<128x128xf32, #tpu.memory_space<vmem>>, vector<128x128xf32>
    %cst = arith.constant dense<0.000000e+00> : vector<256x128xf32>
    %5 = tpu.matmul %3, %4, %cst {dimension_numbers = #tpu.dot_dimension_numbers<[1], [0], [0], [1], [0, 0, 1, 1], [], []>} : vector<256x128xf32>, vector<128x128xf32>, vector<256x128xf32> -> vector<256x128xf32>
    %c0_4 = arith.constant 0 : index
    %c0_5 = arith.constant 0 : index
    %6 = vector.load %arg5[%c0_4, %c0_5] : memref<256x128xf32, #tpu.memory_space<vmem>>, vector<256x128xf32>
    tpu.vector_store %arg5[%c0_4, %c0_5], %5 {strides = array<i32>} : memref<256x128xf32, #tpu.memory_space<vmem>>, vector<256x128xf32>,
    %c0_6 = arith.constant 0 : index
    %c0_7 = arith.constant 0 : index
    %7 = vector.load %arg6[%c0_6, %c0_7] : memref<2x128xf32, #tpu.memory_space<vmem>>, vector<1x128xf32>
    %cst_8 = arith.constant dense<0.000000e+00> : vector<128xf32>
    %8 = vector.multi_reduction <add>, %5, %cst_8 [0] : vector<256x128xf32> to vector<128xf32>
    %9 = vector.shape_cast %8 : vector<128xf32> to vector<1x128xf32>
    %10 = arith.addf %7, %9 : vector<1x128xf32>
    %c0_9 = arith.constant 0 : index
    %c0_10 = arith.constant 0 : index
    %11 = vector.load %arg6[%c0_9, %c0_10] : memref<2x128xf32, #tpu.memory_space<vmem>>, vector<1x128xf32>
    tpu.vector_store %arg6[%c0_9, %c0_10], %10 {strides = array<i32>} : memref<2x128xf32, #tpu.memory_space<vmem>>, vector<1x128xf32>,
    %c1 = arith.constant 1 : index
    %c0_11 = arith.constant 0 : index
    %12 = vector.load %arg6[%c1, %c0_11] : memref<2x128xf32, #tpu.memory_space<vmem>>, vector<1x128xf32>
    %13 = arith.mulf %5, %5 : vector<256x128xf32>
    %cst_12 = arith.constant dense<0.000000e+00> : vector<128xf32>
    %14 = vector.multi_reduction <add>, %13, %cst_12 [0] : vector<256x128xf32> to vector<128xf32>
    %15 = vector.shape_cast %14 : vector<128xf32> to vector<1x128xf32>
    %16 = arith.addf %12, %15 : vector<1x128xf32>
    %c1_13 = arith.constant 1 : index
    %c0_14 = arith.constant 0 : index
    %17 = vector.load %arg6[%c1_13, %c0_14] : memref<2x128xf32, #tpu.memory_space<vmem>>, vector<1x128xf32>
    tpu.vector_store %arg6[%c1_13, %c0_14], %16 {strides = array<i32>} : memref<2x128xf32, #tpu.memory_space<vmem>>, vector<1x128xf32>,
    %c1_i32 = arith.constant 1 : i32
    %18 = arith.cmpi eq, %arg0, %c1_i32 : i32
    %19 = arith.extui %18 : i1 to i32
    %c0_i32_15 = arith.constant 0 : i32
    %20 = arith.cmpi ne, %19, %c0_i32_15 : i32
    scf.if %20 {
      %c0_16 = arith.constant 0 : index
      %c0_17 = arith.constant 0 : index
      %21 = vector.load %arg6[%c0_16, %c0_17] : memref<2x128xf32, #tpu.memory_space<vmem>>, vector<1x128xf32>
      %cst_18 = arith.constant 0.001953125 : f32
      %22 = vector.broadcast %cst_18 : f32 to vector<1x128xf32>
      %23 = arith.mulf %21, %22 : vector<1x128xf32>
      %c1_19 = arith.constant 1 : index
      %c0_20 = arith.constant 0 : index
      %24 = vector.load %arg6[%c1_19, %c0_20] : memref<2x128xf32, #tpu.memory_space<vmem>>, vector<1x128xf32>
      %cst_21 = arith.constant 0.001953125 : f32
      %25 = vector.broadcast %cst_21 : f32 to vector<1x128xf32>
      %26 = arith.mulf %24, %25 : vector<1x128xf32>
      %27 = arith.mulf %23, %23 : vector<1x128xf32>
      %28 = arith.subf %26, %27 : vector<1x128xf32>
      %c0_22 = arith.constant 0 : index
      %c0_23 = arith.constant 0 : index
      %29 = vector.load %arg3[%c0_22, %c0_23] : memref<1x128xf32, #tpu.memory_space<vmem>>, vector<1x128xf32>
      %cst_24 = arith.constant 9.99999974E-6 : f32
      %30 = vector.broadcast %cst_24 : f32 to vector<1x128xf32>
      %31 = arith.addf %28, %30 : vector<1x128xf32>
      %32 = math.rsqrt %31 : vector<1x128xf32>
      %33 = arith.mulf %29, %32 : vector<1x128xf32>
      %c0_25 = arith.constant 0 : index
      %c0_26 = arith.constant 0 : index
      %34 = vector.load %arg4[%c0_25, %c0_26] : memref<1x128xf32, #tpu.memory_space<vmem>>, vector<1x128xf32>
      %35 = arith.mulf %23, %33 : vector<1x128xf32>
      %36 = arith.subf %34, %35 : vector<1x128xf32>
      %c0_27 = arith.constant 0 : index
      %c0_28 = arith.constant 0 : index
      %37 = vector.load %arg6[%c0_27, %c0_28] : memref<2x128xf32, #tpu.memory_space<vmem>>, vector<1x128xf32>
      tpu.vector_store %arg6[%c0_27, %c0_28], %33 {strides = array<i32>} : memref<2x128xf32, #tpu.memory_space<vmem>>, vector<1x128xf32>,
      %c1_29 = arith.constant 1 : index
      %c0_30 = arith.constant 0 : index
      %38 = vector.load %arg6[%c1_29, %c0_30] : memref<2x128xf32, #tpu.memory_space<vmem>>, vector<1x128xf32>
      tpu.vector_store %arg6[%c1_29, %c0_30], %36 {strides = array<i32>} : memref<2x128xf32, #tpu.memory_space<vmem>>, vector<1x128xf32>,
    } else {
    }
    return
  }
  func.func @transform_0(%arg0: i32) -> (i32, i32) {
    %c0_i32 = arith.constant 0 : i32
    %c0_i32_0 = arith.constant 0 : i32
    return %arg0, %c0_i32 : i32, i32
  }
  func.func @transform_1(%arg0: i32) -> (i32, i32) {
    %c0_i32 = arith.constant 0 : i32
    %c0_i32_0 = arith.constant 0 : i32
    %c0_i32_1 = arith.constant 0 : i32
    return %c0_i32, %c0_i32_0 : i32, i32
  }
  func.func @transform_2(%arg0: i32) -> (i32, i32) {
    %c0_i32 = arith.constant 0 : i32
    %c0_i32_0 = arith.constant 0 : i32
    %c0_i32_1 = arith.constant 0 : i32
    return %c0_i32, %c0_i32_0 : i32, i32
  }
  func.func @transform_3(%arg0: i32) -> (i32, i32) {
    %c0_i32 = arith.constant 0 : i32
    %c0_i32_0 = arith.constant 0 : i32
    %c0_i32_1 = arith.constant 0 : i32
    return %c0_i32, %c0_i32_0 : i32, i32
  }
  func.func @transform_4(%arg0: i32) -> (i32, i32) {
    %c0_i32 = arith.constant 0 : i32
    %c0_i32_0 = arith.constant 0 : i32
    return %arg0, %c0_i32 : i32, i32
  }
  func.func @transform_5(%arg0: i32) -> (i32, i32) {
    %c0_i32 = arith.constant 0 : i32
    %c0_i32_0 = arith.constant 0 : i32
    %c0_i32_1 = arith.constant 0 : i32
    return %c0_i32, %c0_i32_0 : i32, i32
  }
}

</mosaic_0001>

<llo_original>
// kernel: tpu_custom_call.1
$region0: #{tpu_custom_call.1}
  #allocation0 [shape = 'u32[]', space=smem, size = 0x4, offset = 0x4, fixed_abs, tag = 'smem constant byte address 0x4 - core index']
  #allocation1 [shape = 'u32[144,128]{1,0:T(1,128)}', space=vmem, size = 0x12000, scoped, tag = 'internal scratch']
  %s0 = inlined_call_operand.hbm [shape: f32[512,128], index: 0, kind: input, shape index: {}]
  %s1 = inlined_call_operand.hbm [shape: f32[128,128], index: 1, kind: input, shape index: {}]
  %s2 = inlined_call_operand.vmem [shape: f32[1,128], index: 2, kind: input, shape index: {}]
  %s3 = inlined_call_operand.vmem [shape: f32[1,128], index: 3, kind: input, shape index: {}]
  %s4 = inlined_call_operand.hbm [shape: f32[512,128], index: 4, kind: output, shape index: {0}]
  %s5 = inlined_call_operand.hbm [shape: f32[2,128], index: 5, kind: output, shape index: {1}]
  %6 = xla_tuple %s4, %s5
  %s7 = sld [smem:[#allocation0]]
  $region73: #{tpu_custom_call.1} parent=0
    _
  %s9 = ssub.s32 1, %s7
  %s10 = scalar_select 0, %s9, %s7
  $region1: #{tpu_custom_call.1} parent=0
    #allocation2 [shape = 'u8[262144]{0}', space=vmem, size = 0x40000, scoped, tag = 'input window, operand 0']
    #allocation3 [shape = 's32[2]{0}', space=sflag, size = 0x8, scoped, tag = 'scoped memory for tpu_custom_call.1']
    #allocation4 [shape = 's32[2]{0}', space=sflag, size = 0x8, scoped, tag = 'scoped memory for tpu_custom_call.1']
    #allocation5 [shape = 'u8[65536]{0}', space=vmem, size = 0x10000, scoped, tag = 'input window, operand 1, single buffered']
    #allocation6 [shape = 's32[1]{0}', space=sflag, size = 0x4, scoped, tag = 'scoped memory for tpu_custom_call.1']
    #allocation7 [shape = 'u8[262144]{0}', space=vmem, size = 0x40000, scoped, tag = 'output window, operand 0']
    #allocation8 [shape = 'u8[1024]{0}', space=vmem, size = 0x400, scoped, tag = 'output window, operand 1, single buffered']
    #allocation9 [shape = 's32[1]{0}', space=sflag, size = 0x4, scoped, tag = 'scoped memory for tpu_custom_call.1']
    %11 = vsyncpa [#allocation3], 0
    %s12 = scalar_lea.sflag [#allocation3], 1
    %13 = vsyncpa %s12, 0
    %14 = vsyncpa [#allocation6], 0
    %15 = vsyncpa [#allocation4], 0
    %s16 = scalar_lea.sflag [#allocation4], 1
    %17 = vsyncpa %s16, 0
    %18 = vsyncpa [#allocation9], 0
    loop: start=0, step=1, limit=4
    $region2: #{tpu_custom_call.1} parent=1 // loop_pre_header
      _
    $region3: #{tpu_custom_call.1} parent=1 // loop_header
      %s20 = sphi 0, %s24
      %p21 = scmp.ge.s32.totalorder %s20, 4
      %s30 = sphi 0, %s32
      %s33 = sphi 0, %s30
      %s34 = sphi 0, %s33
      %s50 = sphi 0, %s34
      %s54 = sphi 0, %s54
      %s56 = sphi 0, %s54
      %s57 = sphi 0, %s56
      %s71 = sphi 0, %s57
      %s75 = sphi 0, %s75
      %s77 = sphi 0, %s75
      %s78 = sphi 0, %s77
      %s92 = sphi 0, %s78
      %s96 = sphi 0, %s96
      %s98 = sphi 0, %s96
      %s99 = sphi 0, %s98
      %s113 = sphi 0, %s99
      %s119 = sphi 0, %s121
      %s122 = sphi 0, %s119
      %s123 = sphi 0, %s122
      %s139 = sphi 0, %s123
      %s143 = sphi 0, %s143
      %s145 = sphi 0, %s143
      %s146 = sphi 0, %s145
      %s160 = sphi 0, %s146
    $region4: #{tpu_custom_call.1} parent=1 // loop_header_branch
      %23 = sbr.rel (%p21) target = $region8
    $region5: #{tpu_custom_call.1} parent=1 // loop_body
      %s25 = ssub.s32 %s20, 1
      %s26 = ssub.s32 %s20, 2
      %s27 = sadd.s32 %s20, 1
      %s28 = ssub.s32 %s20, %s27
      %p29 = scmp.eq.s32.totalorder %s28, 0
      %s31 = sadd.s32 %s30, 1
      %s32 = scalar_select %p29, %s30, %s31
      %p35 = pneg %p29
      %p36 = scmp.eq.s32.totalorder %s20, 1
      %p37 = por %p35, %p36
      %p38 = scmp.ne.s32.totalorder %s30, %s33
      %p39 = scmp.eq.s32.totalorder %s20, 0
      %p40 = por %p38, %p39
      %p41 = scmp.ne.s32.totalorder %s30, %s33
      %p42 = scmp.eq.s32.totalorder %s25, 1
      %p43 = por %p41, %p42
      %p44 = scmp.ne.s32.totalorder %s33, %s34
      %p45 = scmp.eq.s32.totalorder %s25, 0
      %p46 = por %p44, %p45
      %p47 = scmp.ne.s32.totalorder %s33, %s34
      %p48 = scmp.eq.s32.totalorder %s26, 1
      %p49 = por %p47, %p48
      %p51 = scmp.ne.s32.totalorder %s34, %s50
      %p52 = scmp.eq.s32.totalorder %s26, 0
      %p53 = por %p51, %p52
      %s55 = sadd.s32 %s54, 1
      %p58 = scmp.eq.s32.totalorder %s20, 1
      %p59 = scmp.ne.s32.totalorder %s54, %s56
      %p60 = scmp.eq.s32.totalorder %s20, 0
      %p61 = por %p59, %p60
      %p62 = scmp.ne.s32.totalorder %s54, %s56
      %p63 = scmp.eq.s32.totalorder %s25, 1
      %p64 = por %p62, %p63
      %p65 = scmp.ne.s32.totalorder %s56, %s57
      %p66 = scmp.eq.s32.totalorder %s25, 0
      %p67 = por %p65, %p66
      %p68 = scmp.ne.s32.totalorder %s56, %s57
      %p69 = scmp.eq.s32.totalorder %s26, 1
      %p70 = por %p68, %p69
      %p72 = scmp.ne.s32.totalorder %s57, %s71
      %p73 = scmp.eq.s32.totalorder %s26, 0
      %p74 = por %p72, %p73
      %s76 = sadd.s32 %s75, 1
      %p79 = scmp.eq.s32.totalorder %s20, 1
      %p80 = scmp.ne.s32.totalorder %s75, %s77
      %p81 = scmp.eq.s32.totalorder %s20, 0
      %p82 = por %p80, %p81
      %p83 = scmp.ne.s32.totalorder %s75, %s77
      %p84 = scmp.eq.s32.totalorder %s25, 1
      %p85 = por %p83, %p84
      %p86 = scmp.ne.s32.totalorder %s77, %s78
      %p87 = scmp.eq.s32.totalorder %s25, 0
      %p88 = por %p86, %p87
      %p89 = scmp.ne.s32.totalorder %s77, %s78
      %p90 = scmp.eq.s32.totalorder %s26, 1
      %p91 = por %p89, %p90
      %p93 = scmp.ne.s32.totalorder %s78, %s92
      %p94 = scmp.eq.s32.totalorder %s26, 0
      %p95 = por %p93, %p94
      %s97 = sadd.s32 %s96, 1
      %p100 = scmp.eq.s32.totalorder %s20, 1
      %p101 = scmp.ne.s32.totalorder %s96, %s98
      %p102 = scmp.eq.s32.totalorder %s20, 0
      %p103 = por %p101, %p102
      %p104 = scmp.ne.s32.totalorder %s96, %s98
      %p105 = scmp.eq.s32.totalorder %s25, 1
      %p106 = por %p104, %p105
      %p107 = scmp.ne.s32.totalorder %s98, %s99
      %p108 = scmp.eq.s32.totalorder %s25, 0
      %p109 = por %p107, %p108
      %p110 = scmp.ne.s32.totalorder %s98, %s99
      %p111 = scmp.eq.s32.totalorder %s26, 1
      %p112 = por %p110, %p111
      %p114 = scmp.ne.s32.totalorder %s99, %s113
      %p115 = scmp.eq.s32.totalorder %s26, 0
      %p116 = por %p114, %p115
      %s117 = ssub.s32 %s20, %s27
      %p118 = scmp.eq.s32.totalorder %s117, 0
      %s120 = sadd.s32 %s119, 1
      %s121 = scalar_select %p118, %s119, %s120
      %p124 = pneg %p118
      %p125 = scmp.eq.s32.totalorder %s20, 1
      %p126 = por %p124, %p125
      %p127 = scmp.ne.s32.totalorder %s119, %s122
      %p128 = scmp.eq.s32.totalorder %s20, 0
      %p129 = por %p127, %p128
      %p130 = scmp.ne.s32.totalorder %s119, %s122
      %p131 = scmp.eq.s32.totalorder %s25, 1
      %p132 = por %p130, %p131
      %p133 = scmp.ne.s32.totalorder %s122, %s123
      %p134 = scmp.eq.s32.totalorder %s25, 0
      %p135 = por %p133, %p134
      %p136 = scmp.ne.s32.totalorder %s122, %s123
      %p137 = scmp.eq.s32.totalorder %s26, 1
      %p138 = por %p136, %p137
      %p140 = scmp.ne.s32.totalorder %s123, %s139
      %p141 = scmp.eq.s32.totalorder %s26, 0
      %p142 = por %p140, %p141
      %s144 = sadd.s32 %s143, 1
      %p147 = scmp.eq.s32.totalorder %s20, 1
      %p148 = scmp.ne.s32.totalorder %s143, %s145
      %p149 = scmp.eq.s32.totalorder %s20, 0
      %p150 = por %p148, %p149
      %p151 = scmp.ne.s32.totalorder %s143, %s145
      %p152 = scmp.eq.s32.totalorder %s25, 1
      %p153 = por %p151, %p152
      %p154 = scmp.ne.s32.totalorder %s145, %s146
      %p155 = scmp.eq.s32.totalorder %s25, 0
      %p156 = por %p154, %p155
      %p157 = scmp.ne.s32.totalorder %s145, %s146
      %p158 = scmp.eq.s32.totalorder %s26, 1
      %p159 = por %p157, %p158
      %p161 = scmp.ne.s32.totalorder %s146, %s160
      %p162 = scmp.eq.s32.totalorder %s26, 0
      %p163 = por %p161, %p162
      %p164 = scmp.le.s32.totalorder 1, %s20
      %p165 = scmp.lt.s32.totalorder %s20, 3
      %p166 = pnand %p164, %p165
      %p167 = pneg %p166
      // Predicated region
      $region9: #{tpu_custom_call.1} parent=5 // pred_check
        _
      $region10: #{tpu_custom_call.1} parent=5 // pred_check_branch
        %169 = sbr.rel (%p166) target = $region12
      $region11: #{tpu_custom_call.1} parent=5 // pred_region
        %s170 = ssub.s32 %s20, 1
        // Predicated region
        $region13: #{tpu_custom_call.1} parent=11 // pred_check
          %p171 = pneg %p67
        $region14: #{tpu_custom_call.1} parent=11 // pred_check_branch
          %173 = sbr.rel (%p171) target = $region16
        $region15: #{tpu_custom_call.1} parent=11 // pred_region
          %s175 = ssub.s32 2048, 2048
          %176 = vsyncadd [#allocation6], %s175
          %s177 = sshll.u32 [#allocation5], 4
          %s178 = int_to_ptr.vmem [resolvable:$true] %s177
          %183 = dma.hbm_to_vmem [thread:$0]  %s1, 2048, %s178, [#allocation6], 128, 128, 8
        $region16: #{tpu_custom_call.1} parent=11 // pred_fallthru
          _
        // Predicated region
        $region17: #{tpu_custom_call.1} parent=11 // pred_check
          %p184 = pneg %p88
        $region18: #{tpu_custom_call.1} parent=11 // pred_check_branch
          %186 = sbr.rel (%p184) target = $region20
        $region19: #{tpu_custom_call.1} parent=11 // pred_region
          _
        $region20: #{tpu_custom_call.1} parent=11 // pred_fallthru
          _
        // Predicated region
        $region21: #{tpu_custom_call.1} parent=11 // pred_check
          %p187 = pneg %p109
        $region22: #{tpu_custom_call.1} parent=11 // pred_check_branch
          %189 = sbr.rel (%p187) target = $region24
        $region23: #{tpu_custom_call.1} parent=11 // pred_region
          _
        $region24: #{tpu_custom_call.1} parent=11 // pred_fallthru
          _
      $region12: #{tpu_custom_call.1} parent=5 // pred_fallthru
        _
      %p190 = scmp.lt.s32.totalorder %s20, 2
      // Predicated region
      $region25: #{tpu_custom_call.1} parent=5 // pred_check
        %p191 = pneg %p190
      $region26: #{tpu_custom_call.1} parent=5 // pred_check_branch
        %193 = sbr.rel (%p191) target = $region28
      $region27: #{tpu_custom_call.1} parent=5 // pred_region
        // Predicated region
        $region29: #{tpu_custom_call.1} parent=27 // pred_check
          %p194 = pneg %p40
        $region30: #{tpu_custom_call.1} parent=27 // pred_check_branch
          %196 = sbr.rel (%p194) target = $region32
        $region31: #{tpu_custom_call.1} parent=27 // pred_region
          %s197 = sand.u32 %s30, 1
          %s198 = scalar_lea.sflag [#allocation3], %s197
          %s199 = sand.u32 %s30, 1
          %s200 = smul.addr %s199, 256
          %s201 = scalar_lea.vmem [#allocation2], %s200
          %s202 = smul.u32 32, %s20
          %s204 = ssub.s32 4096, 4096
          %205 = vsyncadd %s198, %s204
          %s206 = smul.addr %s202, 128
          %s207 = scalar_lea.hbm %s0, %s206
          %s208 = sshll.u32 %s201, 4
          %s209 = int_to_ptr.vmem [resolvable:$true] %s208
          %214 = dma.hbm_to_vmem [thread:$0]  %s207, 4096, %s209, %s198, 128, 128, 8
        $region32: #{tpu_custom_call.1} parent=27 // pred_fallthru
          _
      $region28: #{tpu_custom_call.1} parent=5 // pred_fallthru
        _
      %p215 = scmp.le.s32.totalorder 1, %s20
      %p216 = scmp.lt.s32.totalorder %s20, 3
      %p217 = pnand %p215, %p216
      %p218 = pneg %p217
      // Predicated region
      $region33: #{tpu_custom_call.1} parent=5 // pred_check
        _
      $region34: #{tpu_custom_call.1} parent=5 // pred_check_branch
        %220 = sbr.rel (%p217) target = $region36
      $region35: #{tpu_custom_call.1} parent=5 // pred_region
        %s221 = ssub.s32 %s20, 1
        %s222 = sand.u32 %s33, 1
        %s223 = scalar_lea.sflag [#allocation3], %s222
        %s224 = sand.u32 %s33, 1
        %s225 = smul.addr %s224, 256
        %s226 = scalar_lea.vmem [#allocation2], %s225
        // Predicated region
        $region37: #{tpu_custom_call.1} parent=35 // pred_check
          %p227 = pneg %p46
        $region38: #{tpu_custom_call.1} parent=35 // pred_check_branch
          %229 = sbr.rel (%p227) target = $region40
        $region39: #{tpu_custom_call.1} parent=35 // pred_region
          %230 = dma.done %s223, 4096
        $region40: #{tpu_custom_call.1} parent=35 // pred_fallthru
          _
        // Predicated region
        $region41: #{tpu_custom_call.1} parent=35 // pred_check
          %p231 = pneg %p67
        $region42: #{tpu_custom_call.1} parent=35 // pred_check_branch
          %233 = sbr.rel (%p231) target = $region44
        $region43: #{tpu_custom_call.1} parent=35 // pred_region
          %234 = dma.done [#allocation6], 2048
        $region44: #{tpu_custom_call.1} parent=35 // pred_fallthru
          _
        %s235 = sand.u32 %s33, 1
        %s236 = scalar_lea.sflag [#allocation3], %s235
        %s237 = sand.u32 %s33, 1
        %s238 = smul.addr %s237, 256
        %s239 = scalar_lea.vmem [#allocation2], %s238
        %p240 = pneg %p46
        %p241 = pneg %p43
        %p242 = pneg %p67
        %p243 = pneg %p64
        %p244 = pneg %p88
        %p245 = pneg %p85
        %p246 = pneg %p109
        %p247 = pneg %p106
        %p248 = pneg %p135
        %p249 = pneg %p132
        %s250 = sand.u32 %s122, 1
        %s251 = scalar_lea.sflag [#allocation4], %s250
        %s252 = sand.u32 %s122, 1
        %s253 = smul.addr %s252, 256
        %s254 = scalar_lea.vmem [#allocation7], %s253
        %p255 = pneg %p156
        %p256 = pneg %p153
        %s257 = smul.u32 32, %s25
        %s258 = smul.u32 32, %s25
        %p259 = scmp.eq.s32.totalorder %s25, 0
        // Predicated region
        $region45: #{tpu_custom_call.1} parent=35 // pred_check
          %p260 = pneg %p259
        $region46: #{tpu_custom_call.1} parent=35 // pred_check_branch
          %262 = sbr.rel (%p260) target = $region48
        $region47: #{tpu_custom_call.1} parent=35 // pred_region
          %263 = vst [vmem:[#allocation8] sm:$0x3] 0.0
        $region48: #{tpu_custom_call.1} parent=35 // pred_fallthru
          _
        %v264 = vld [vmem:[%s226] sm:$0xff]
        %v265 = vld [vmem:[%s226 + $0x8] sm:$0xff]
        %v266 = vld [vmem:[%s226 + $0x10] sm:$0xff]
        %v267 = vld [vmem:[%s226 + $0x18] sm:$0xff]
        %v268 = vld [vmem:[%s226 + $0x20] sm:$0xff]
        %v269 = vld [vmem:[%s226 + $0x28] sm:$0xff]
        %v270 = vld [vmem:[%s226 + $0x30] sm:$0xff]
        %v271 = vld [vmem:[%s226 + $0x38] sm:$0xff]
        %v272 = vld [vmem:[%s226 + $0x40] sm:$0xff]
        %v273 = vld [vmem:[%s226 + $0x48] sm:$0xff]
        %v274 = vld [vmem:[%s226 + $0x50] sm:$0xff]
        %v275 = vld [vmem:[%s226 + $0x58] sm:$0xff]
        %v276 = vld [vmem:[%s226 + $0x60] sm:$0xff]
        %v277 = vld [vmem:[%s226 + $0x68] sm:$0xff]
        %v278 = vld [vmem:[%s226 + $0x70] sm:$0xff]
        %v279 = vld [vmem:[%s226 + $0x78] sm:$0xff]
        %v280 = vld [vmem:[%s226 + $0x80] sm:$0xff]
        %v281 = vld [vmem:[%s226 + $0x88] sm:$0xff]
        %v282 = vld [vmem:[%s226 + $0x90] sm:$0xff]
        %v283 = vld [vmem:[%s226 + $0x98] sm:$0xff]
        %v284 = vld [vmem:[%s226 + $0xa0] sm:$0xff]
        %v285 = vld [vmem:[%s226 + $0xa8] sm:$0xff]
        %v286 = vld [vmem:[%s226 + $0xb0] sm:$0xff]
        %v287 = vld [vmem:[%s226 + $0xb8] sm:$0xff]
        %v288 = vld [vmem:[%s226 + $0xc0] sm:$0xff]
        %v289 = vld [vmem:[%s226 + $0xc8] sm:$0xff]
        %v290 = vld [vmem:[%s226 + $0xd0] sm:$0xff]
        %v291 = vld [vmem:[%s226 + $0xd8] sm:$0xff]
        %v292 = vld [vmem:[%s226 + $0xe0] sm:$0xff]
        %v293 = vld [vmem:[%s226 + $0xe8] sm:$0xff]
        %v294 = vld [vmem:[%s226 + $0xf0] sm:$0xff]
        %v295 = vld [vmem:[%s226 + $0xf8] sm:$0xff]
        %v296 = vld [vmem:[#allocation5] sm:$0xff]
        %v297 = vld [vmem:[#allocation5 + $0x8] sm:$0xff]
        %v298 = vld [vmem:[#allocation5 + $0x10] sm:$0xff]
        %v299 = vld [vmem:[#allocation5 + $0x18] sm:$0xff]
        %v300 = vld [vmem:[#allocation5 + $0x20] sm:$0xff]
        %v301 = vld [vmem:[#allocation5 + $0x28] sm:$0xff]
        %v302 = vld [vmem:[#allocation5 + $0x30] sm:$0xff]
        %v303 = vld [vmem:[#allocation5 + $0x38] sm:$0xff]
        %v304 = vld [vmem:[#allocation5 + $0x40] sm:$0xff]
        %v305 = vld [vmem:[#allocation5 + $0x48] sm:$0xff]
        %v306 = vld [vmem:[#allocation5 + $0x50] sm:$0xff]
        %v307 = vld [vmem:[#allocation5 + $0x58] sm:$0xff]
        %v308 = vld [vmem:[#allocation5 + $0x60] sm:$0xff]
        %v309 = vld [vmem:[#allocation5 + $0x68] sm:$0xff]
        %v310 = vld [vmem:[#allocation5 + $0x70] sm:$0xff]
        %v311 = vld [vmem:[#allocation5 + $0x78] sm:$0xff]
        %312 = vmatprep.subr.mxu0 0.0
        %313 = vmatpush1.msra.mxu0 %v311
        %314 = vmatprep.subr.mxu0 0.0
        %315 = vmatpush1.msra.mxu0 %v310
        %316 = vmatprep.subr.mxu0 0.0
        %317 = vmatpush1.msra.mxu0 %v309
        %318 = vmatprep.subr.mxu0 0.0
        %319 = vmatpush1.msra.mxu0 %v308
        %320 = vmatprep.subr.mxu0 0.0
        %321 = vmatpush1.msra.mxu0 %v307
        %322 = vmatprep.subr.mxu0 0.0
        %323 = vmatpush1.msra.mxu0 %v306
        %324 = vmatprep.subr.mxu0 0.0
        %325 = vmatpush1.msra.mxu0 %v305
        %326 = vmatprep.subr.mxu0 0.0
        %327 = vmatpush1.msra.mxu0 %v304
        %328 = vmatprep.subr.mxu0 0.0
        %329 = vmatpush1.msra.mxu0 %v303
        %330 = vmatprep.subr.mxu0 0.0
        %331 = vmatpush1.msra.mxu0 %v302
        %332 = vmatprep.subr.mxu0 0.0
        %333 = vmatpush1.msra.mxu0 %v301
        %334 = vmatprep.subr.mxu0 0.0
        %335 = vmatpush1.msra.mxu0 %v300
        %336 = vmatprep.subr.mxu0 0.0
        %337 = vmatpush1.msra.mxu0 %v299
        %338 = vmatprep.subr.mxu0 0.0
        %339 = vmatpush1.msra.mxu0 %v298
        %340 = vmatprep.subr.mxu0 0.0
        %341 = vmatpush1.msra.mxu0 %v297
        %342 = vmatprep.subr.mxu0 0.0
        %343 = vmatpush1.msra.mxu0 %v296
        %344 = vmatprep.subr.mxu0 0.0
        %345 = vmatpush2.msra.mxu0 0.0
        %346 = vmatprep.subr.mxu0 0.0
        %347 = vmatpush2.msra.mxu0 0.0
        %348 = vmatprep.subr.mxu0 0.0
        %349 = vmatpush2.msra.mxu0 0.0
        %350 = vmatprep.subr.mxu0 0.0
        %351 = vmatpush2.msra.mxu0 0.0
        %352 = vmatprep.subr.mxu0 0.0
        %353 = vmatpush2.msra.mxu0 0.0
        %354 = vmatprep.subr.mxu0 0.0
        %355 = vmatpush2.msra.mxu0 0.0
        %356 = vmatprep.subr.mxu0 0.0
        %357 = vmatpush2.msra.mxu0 0.0
        %358 = vmatprep.subr.mxu0 0.0
        %359 = vmatpush2.msra.mxu0 0.0
        %360 = vmatprep.subr.mxu0 0.0
        %361 = vmatpush2.msra.mxu0 0.0
        %362 = vmatprep.subr.mxu0 0.0
        %363 = vmatpush2.msra.mxu0 0.0
        %364 = vmatprep.subr.mxu0 0.0
        %365 = vmatpush2.msra.mxu0 0.0
        %366 = vmatprep.subr.mxu0 0.0
        %367 = vmatpush2.msra.mxu0 0.0
        %368 = vmatprep.subr.mxu0 0.0
        %369 = vmatpush2.msra.mxu0 0.0
        %370 = vmatprep.subr.mxu0 0.0
        %371 = vmatpush2.msra.mxu0 0.0
        %372 = vmatprep.subr.mxu0 0.0
        %373 = vmatpush2.msra.mxu0 0.0
        %374 = vmatprep.subr.mxu0 0.0
        %375 = vmatpush2.msra.mxu0 0.0
        %376 = vmatprep.mubr.f32.mxu0 0.0
        %377 = vmatmul.mubr.f32.gmra.mxu0 %v264
        %v378 = vpop.f32.mrf.mxu0
        %v379 = vadd.f32 0.0, %v378
        %v380 = vpop.f32.mrf.mxu0
        %381 = vmatprep.mubr.f32.mxu0 0.0
        %382 = vmatmul.mubr.f32.gmra.mxu0 %v265
        %v383 = vpop.f32.mrf.mxu0
        %v384 = vadd.f32 0.0, %v383
        %v385 = vpop.f32.mrf.mxu0
        %386 = vmatprep.mubr.f32.mxu0 0.0
        %387 = vmatmul.mubr.f32.gmra.mxu0 %v266
        %v388 = vpop.f32.mrf.mxu0
        %v389 = vadd.f32 0.0, %v388
        %v390 = vpop.f32.mrf.mxu0
        %391 = vmatprep.mubr.f32.mxu0 0.0
        %392 = vmatmul.mubr.f32.gmra.mxu0 %v267
        %v393 = vpop.f32.mrf.mxu0
        %v394 = vadd.f32 0.0, %v393
        %v395 = vpop.f32.mrf.mxu0
        %396 = vmatprep.mubr.f32.mxu0 0.0
        %397 = vmatmul.mubr.f32.gmra.mxu0 %v268
        %v398 = vpop.f32.mrf.mxu0
        %v399 = vadd.f32 0.0, %v398
        %v400 = vpop.f32.mrf.mxu0
        %401 = vmatprep.mubr.f32.mxu0 0.0
        %402 = vmatmul.mubr.f32.gmra.mxu0 %v269
        %v403 = vpop.f32.mrf.mxu0
        %v404 = vadd.f32 0.0, %v403
        %v405 = vpop.f32.mrf.mxu0
        %406 = vmatprep.mubr.f32.mxu0 0.0
        %407 = vmatmul.mubr.f32.gmra.mxu0 %v270
        %v408 = vpop.f32.mrf.mxu0
        %v409 = vadd.f32 0.0, %v408
        %v410 = vpop.f32.mrf.mxu0
        %411 = vmatprep.mubr.f32.mxu0 0.0
        %412 = vmatmul.mubr.f32.gmra.mxu0 %v271
        %v413 = vpop.f32.mrf.mxu0
        %v414 = vadd.f32 0.0, %v413
        %v415 = vpop.f32.mrf.mxu0
        %416 = vmatprep.mubr.f32.mxu0 0.0
        %417 = vmatmul.mubr.f32.gmra.mxu0 %v272
        %v418 = vpop.f32.mrf.mxu0
        %v419 = vadd.f32 0.0, %v418
        %v420 = vpop.f32.mrf.mxu0
        %421 = vmatprep.mubr.f32.mxu0 0.0
        %422 = vmatmul.mubr.f32.gmra.mxu0 %v273
        %v423 = vpop.f32.mrf.mxu0
        %v424 = vadd.f32 0.0, %v423
        %v425 = vpop.f32.mrf.mxu0
        %426 = vmatprep.mubr.f32.mxu0 0.0
        %427 = vmatmul.mubr.f32.gmra.mxu0 %v274
        %v428 = vpop.f32.mrf.mxu0
        %v429 = vadd.f32 0.0, %v428
        %v430 = vpop.f32.mrf.mxu0
        %431 = vmatprep.mubr.f32.mxu0 0.0
        %432 = vmatmul.mubr.f32.gmra.mxu0 %v275
        %v433 = vpop.f32.mrf.mxu0
        %v434 = vadd.f32 0.0, %v433
        %v435 = vpop.f32.mrf.mxu0
        %436 = vmatprep.mubr.f32.mxu0 0.0
        %437 = vmatmul.mubr.f32.gmra.mxu0 %v276
        %v438 = vpop.f32.mrf.mxu0
        %v439 = vadd.f32 0.0, %v438
        %v440 = vpop.f32.mrf.mxu0
        %441 = vmatprep.mubr.f32.mxu0 0.0
        %442 = vmatmul.mubr.f32.gmra.mxu0 %v277
        %v443 = vpop.f32.mrf.mxu0
        %v444 = vadd.f32 0.0, %v443
        %v445 = vpop.f32.mrf.mxu0
        %446 = vmatprep.mubr.f32.mxu0 0.0
        %447 = vmatmul.mubr.f32.gmra.mxu0 %v278
        %v448 = vpop.f32.mrf.mxu0
        %v449 = vadd.f32 0.0, %v448
        %v450 = vpop.f32.mrf.mxu0
        %451 = vmatprep.mubr.f32.mxu0 0.0
        %452 = vmatmul.mubr.f32.gmra.mxu0 %v279
        %v453 = vpop.f32.mrf.mxu0
        %v454 = vadd.f32 0.0, %v453
        %v455 = vpop.f32.mrf.mxu0
        %456 = vmatprep.mubr.f32.mxu0 0.0
        %457 = vmatmul.mubr.f32.gmra.mxu0 %v280
        %v458 = vpop.f32.mrf.mxu0
        %v459 = vadd.f32 0.0, %v458
        %v460 = vpop.f32.mrf.mxu0
        %461 = vmatprep.mubr.f32.mxu0 0.0
        %462 = vmatmul.mubr.f32.gmra.mxu0 %v281
        %v463 = vpop.f32.mrf.mxu0
        %v464 = vadd.f32 0.0, %v463
        %v465 = vpop.f32.mrf.mxu0
        %466 = vmatprep.mubr.f32.mxu0 0.0
        %467 = vmatmul.mubr.f32.gmra.mxu0 %v282
        %v468 = vpop.f32.mrf.mxu0
        %v469 = vadd.f32 0.0, %v468
        %v470 = vpop.f32.mrf.mxu0
        %471 = vmatprep.mubr.f32.mxu0 0.0
        %472 = vmatmul.mubr.f32.gmra.mxu0 %v283
        %v473 = vpop.f32.mrf.mxu0
        %v474 = vadd.f32 0.0, %v473
        %v475 = vpop.f32.mrf.mxu0
        %476 = vmatprep.mubr.f32.mxu0 0.0
        %477 = vmatmul.mubr.f32.gmra.mxu0 %v284
        %v478 = vpop.f32.mrf.mxu0
        %v479 = vadd.f32 0.0, %v478
        %v480 = vpop.f32.mrf.mxu0
        %481 = vmatprep.mubr.f32.mxu0 0.0
        %482 = vmatmul.mubr.f32.gmra.mxu0 %v285
        %v483 = vpop.f32.mrf.mxu0
        %v484 = vadd.f32 0.0, %v483
        %v485 = vpop.f32.mrf.mxu0
        %486 = vmatprep.mubr.f32.mxu0 0.0
        %487 = vmatmul.mubr.f32.gmra.mxu0 %v286
        %v488 = vpop.f32.mrf.mxu0
        %v489 = vadd.f32 0.0, %v488
        %v490 = vpop.f32.mrf.mxu0
        %491 = vmatprep.mubr.f32.mxu0 0.0
        %492 = vmatmul.mubr.f32.gmra.mxu0 %v287
        %v493 = vpop.f32.mrf.mxu0
        %v494 = vadd.f32 0.0, %v493
        %v495 = vpop.f32.mrf.mxu0
        %496 = vmatprep.mubr.f32.mxu0 0.0
        %497 = vmatmul.mubr.f32.gmra.mxu0 %v288
        %v498 = vpop.f32.mrf.mxu0
        %v499 = vadd.f32 0.0, %v498
        %v500 = vpop.f32.mrf.mxu0
        %501 = vmatprep.mubr.f32.mxu0 0.0
        %502 = vmatmul.mubr.f32.gmra.mxu0 %v289
        %v503 = vpop.f32.mrf.mxu0
        %v504 = vadd.f32 0.0, %v503
        %v505 = vpop.f32.mrf.mxu0
        %506 = vmatprep.mubr.f32.mxu0 0.0
        %507 = vmatmul.mubr.f32.gmra.mxu0 %v290
        %v508 = vpop.f32.mrf.mxu0
        %v509 = vadd.f32 0.0, %v508
        %v510 = vpop.f32.mrf.mxu0
        %511 = vmatprep.mubr.f32.mxu0 0.0
        %512 = vmatmul.mubr.f32.gmra.mxu0 %v291
        %v513 = vpop.f32.mrf.mxu0
        %v514 = vadd.f32 0.0, %v513
        %v515 = vpop.f32.mrf.mxu0
        %516 = vmatprep.mubr.f32.mxu0 0.0
        %517 = vmatmul.mubr.f32.gmra.mxu0 %v292
        %v518 = vpop.f32.mrf.mxu0
        %v519 = vadd.f32 0.0, %v518
        %v520 = vpop.f32.mrf.mxu0
        %521 = vmatprep.mubr.f32.mxu0 0.0
        %522 = vmatmul.mubr.f32.gmra.mxu0 %v293
        %v523 = vpop.f32.mrf.mxu0
        %v524 = vadd.f32 0.0, %v523
        %v525 = vpop.f32.mrf.mxu0
        %526 = vmatprep.mubr.f32.mxu0 0.0
        %527 = vmatmul.mubr.f32.gmra.mxu0 %v294
        %v528 = vpop.f32.mrf.mxu0
        %v529 = vadd.f32 0.0, %v528
        %v530 = vpop.f32.mrf.mxu0
        %531 = vmatprep.mubr.f32.mxu0 0.0
        %532 = vmatmul.mubr.f32.gmra.mxu0 %v295
        %v533 = vpop.f32.mrf.mxu0
        %v534 = vadd.f32 0.0, %v533
        %v535 = vpop.f32.mrf.mxu0
        %536 = vdwg.mxu0
        %537 = vst [vmem:[%s254] sm:$0xff] %v379
        %538 = vst [vmem:[%s254 + $0x8] sm:$0xff] %v384
        %539 = vst [vmem:[%s254 + $0x10] sm:$0xff] %v389
        %540 = vst [vmem:[%s254 + $0x18] sm:$0xff] %v394
        %541 = vst [vmem:[%s254 + $0x20] sm:$0xff] %v399
        %542 = vst [vmem:[%s254 + $0x28] sm:$0xff] %v404
        %543 = vst [vmem:[%s254 + $0x30] sm:$0xff] %v409
        %544 = vst [vmem:[%s254 + $0x38] sm:$0xff] %v414
        %545 = vst [vmem:[%s254 + $0x40] sm:$0xff] %v419
        %546 = vst [vmem:[%s254 + $0x48] sm:$0xff] %v424
        %547 = vst [vmem:[%s254 + $0x50] sm:$0xff] %v429
        %548 = vst [vmem:[%s254 + $0x58] sm:$0xff] %v434
        %549 = vst [vmem:[%s254 + $0x60] sm:$0xff] %v439
        %550 = vst [vmem:[%s254 + $0x68] sm:$0xff] %v444
        %551 = vst [vmem:[%s254 + $0x70] sm:$0xff] %v449
        %552 = vst [vmem:[%s254 + $0x78] sm:$0xff] %v454
        %553 = vst [vmem:[%s254 + $0x80] sm:$0xff] %v459
        %554 = vst [vmem:[%s254 + $0x88] sm:$0xff] %v464
        %555 = vst [vmem:[%s254 + $0x90] sm:$0xff] %v469
        %556 = vst [vmem:[%s254 + $0x98] sm:$0xff] %v474
        %557 = vst [vmem:[%s254 + $0xa0] sm:$0xff] %v479
        %558 = vst [vmem:[%s254 + $0xa8] sm:$0xff] %v484
        %559 = vst [vmem:[%s254 + $0xb0] sm:$0xff] %v489
        %560 = vst [vmem:[%s254 + $0xb8] sm:$0xff] %v494
        %561 = vst [vmem:[%s254 + $0xc0] sm:$0xff] %v499
        %562 = vst [vmem:[%s254 + $0xc8] sm:$0xff] %v504
        %563 = vst [vmem:[%s254 + $0xd0] sm:$0xff] %v509
        %564 = vst [vmem:[%s254 + $0xd8] sm:$0xff] %v514
        %565 = vst [vmem:[%s254 + $0xe0] sm:$0xff] %v519
        %566 = vst [vmem:[%s254 + $0xe8] sm:$0xff] %v524
        %567 = vst [vmem:[%s254 + $0xf0] sm:$0xff] %v529
        %568 = vst [vmem:[%s254 + $0xf8] sm:$0xff] %v534
        %v569 = vld [vmem:[#allocation8] sm:$0x1]
        %v570 = vadd.f32 %v379, %v384
        %v571 = vadd.f32 %v570, %v389
        %v572 = vadd.f32 %v571, %v394
        %v573 = vadd.f32 %v572, %v399
        %v574 = vadd.f32 %v573, %v404
        %v575 = vadd.f32 %v574, %v409
        %v576 = vadd.f32 %v575, %v414
        %v577 = vadd.f32 %v576, %v419
        %v578 = vadd.f32 %v577, %v424
        %v579 = vadd.f32 %v578, %v429
        %v580 = vadd.f32 %v579, %v434
        %v581 = vadd.f32 %v580, %v439
        %v582 = vadd.f32 %v581, %v444
        %v583 = vadd.f32 %v582, %v449
        %v584 = vadd.f32 %v583, %v454
        %v585 = vadd.f32 %v584, %v459
        %v586 = vadd.f32 %v585, %v464
        %v587 = vadd.f32 %v586, %v469
        %v588 = vadd.f32 %v587, %v474
        %v589 = vadd.f32 %v588, %v479
        %v590 = vadd.f32 %v589, %v484
        %v591 = vadd.f32 %v590, %v489
        %v592 = vadd.f32 %v591, %v494
        %v593 = vadd.f32 %v592, %v499
        %v594 = vadd.f32 %v593, %v504
        %v595 = vadd.f32 %v594, %v509
        %v596 = vadd.f32 %v595, %v514
        %v597 = vadd.f32 %v596, %v519
        %v598 = vadd.f32 %v597, %v524
        %v599 = vadd.f32 %v598, %v529
        %v600 = vadd.f32 %v599, %v534
        %v601 = vrot.slane %v600, 4
        %v602 = vadd.f32 %v600, %v601
        %v603 = vrot.slane %v602, 2
        %v604 = vadd.f32 %v602, %v603
        %v605 = vrot.slane %v604, 1
        %v606 = vadd.f32 %v604, %v605
        %v607 = vadd.f32 %v569, %v606
        %608 = vst [vmem:[#allocation8] sm:$0x1] %v607
        %v609 = vld [vmem:[#allocation8 + $0x1] sm:$0x1]
        %v610 = vmul.f32 %v379, %v379
        %v611 = vmul.f32 %v384, %v384
        %v612 = vmul.f32 %v389, %v389
        %v613 = vmul.f32 %v394, %v394
        %v614 = vmul.f32 %v399, %v399
        %v615 = vmul.f32 %v404, %v404
        %v616 = vmul.f32 %v409, %v409
        %v617 = vmul.f32 %v414, %v414
        %v618 = vmul.f32 %v419, %v419
        %v619 = vmul.f32 %v424, %v424
        %v620 = vmul.f32 %v429, %v429
        %v621 = vmul.f32 %v434, %v434
        %v622 = vmul.f32 %v439, %v439
        %v623 = vmul.f32 %v444, %v444
        %v624 = vmul.f32 %v449, %v449
        %v625 = vmul.f32 %v454, %v454
        %v626 = vmul.f32 %v459, %v459
        %v627 = vmul.f32 %v464, %v464
        %v628 = vmul.f32 %v469, %v469
        %v629 = vmul.f32 %v474, %v474
        %v630 = vmul.f32 %v479, %v479
        %v631 = vmul.f32 %v484, %v484
        %v632 = vmul.f32 %v489, %v489
        %v633 = vmul.f32 %v494, %v494
        %v634 = vmul.f32 %v499, %v499
        %v635 = vmul.f32 %v504, %v504
        %v636 = vmul.f32 %v509, %v509
        %v637 = vmul.f32 %v514, %v514
        %v638 = vmul.f32 %v519, %v519
        %v639 = vmul.f32 %v524, %v524
        %v640 = vmul.f32 %v529, %v529
        %v641 = vmul.f32 %v534, %v534
        %v642 = vadd.f32 %v610, %v611
        %v643 = vadd.f32 %v642, %v612
        %v644 = vadd.f32 %v643, %v613
        %v645 = vadd.f32 %v644, %v614
        %v646 = vadd.f32 %v645, %v615
        %v647 = vadd.f32 %v646, %v616
        %v648 = vadd.f32 %v647, %v617
        %v649 = vadd.f32 %v648, %v618
        %v650 = vadd.f32 %v649, %v619
        %v651 = vadd.f32 %v650, %v620
        %v652 = vadd.f32 %v651, %v621
        %v653 = vadd.f32 %v652, %v622
        %v654 = vadd.f32 %v653, %v623
        %v655 = vadd.f32 %v654, %v624
        %v656 = vadd.f32 %v655, %v625
        %v657 = vadd.f32 %v656, %v626
        %v658 = vadd.f32 %v657, %v627
        %v659 = vadd.f32 %v658, %v628
        %v660 = vadd.f32 %v659, %v629
        %v661 = vadd.f32 %v660, %v630
        %v662 = vadd.f32 %v661, %v631
        %v663 = vadd.f32 %v662, %v632
        %v664 = vadd.f32 %v663, %v633
        %v665 = vadd.f32 %v664, %v634
        %v666 = vadd.f32 %v665, %v635
        %v667 = vadd.f32 %v666, %v636
        %v668 = vadd.f32 %v667, %v637
        %v669 = vadd.f32 %v668, %v638
        %v670 = vadd.f32 %v669, %v639
        %v671 = vadd.f32 %v670, %v640
        %v672 = vadd.f32 %v671, %v641
        %v673 = vrot.slane %v672, 4
        %v674 = vadd.f32 %v672, %v673
        %v675 = vrot.slane %v674, 2
        %v676 = vadd.f32 %v674, %v675
        %v677 = vrot.slane %v676, 1
        %v678 = vadd.f32 %v676, %v677
        %v679 = vadd.f32 %v609, %v678
        %680 = vst [vmem:[#allocation8 + $0x1] sm:$0x1] %v679
        %p681 = scmp.eq.s32.totalorder %s25, 1
        // Predicated region
        $region49: #{tpu_custom_call.1} parent=35 // pred_check
          %p682 = pneg %p681
        $region50: #{tpu_custom_call.1} parent=35 // pred_check_branch
          %684 = sbr.rel (%p682) target = $region52
        $region51: #{tpu_custom_call.1} parent=35 // pred_region
          %v685 = vld [vmem:[#allocation8] sm:$0x1]
          %v686 = vmul.f32 %v685, 0.001953125
          %v687 = vld [vmem:[#allocation8 + $0x1] sm:$0x1]
          %v688 = vmul.f32 %v687, 0.001953125
          %v689 = vmul.f32 %v686, %v686
          %v690 = vsub.f32 %v688, %v689
          %v691 = vld [vmem:[%s2] sm:$0x1]
          %v692 = vadd.f32 %v690, 1e-05
          %v693 = vrsqrt.pop %v692
          %v694 = vmul.f32 %v691, %v693
          %v695 = vld [vmem:[%s3] sm:$0x1]
          %v696 = vmul.f32 %v686, %v694
          %v697 = vsub.f32 %v695, %v696
          %698 = vst [vmem:[#allocation8] sm:$0x1] %v694
          %699 = vst [vmem:[#allocation8 + $0x1] sm:$0x1] %v697
        $region52: #{tpu_custom_call.1} parent=35 // pred_fallthru
          _
        %s700 = sand.u32 %s122, 1
        %s701 = scalar_lea.sflag [#allocation4], %s700
        %s702 = sand.u32 %s122, 1
        %s703 = smul.addr %s702, 256
        %s704 = scalar_lea.vmem [#allocation7], %s703
        // Predicated region
        $region53: #{tpu_custom_call.1} parent=35 // pred_check
          %p705 = pneg %p132
        $region54: #{tpu_custom_call.1} parent=35 // pred_check_branch
          %707 = sbr.rel (%p705) target = $region56
        $region55: #{tpu_custom_call.1} parent=35 // pred_region
          %s708 = smul.u32 32, %s25
          %s710 = ssub.s32 4096, 4096
          %711 = vsyncadd %s701, %s710
          %s712 = smul.addr %s708, 128
          %s713 = scalar_lea.hbm %s4, %s712
          %s714 = sshll.u32 %s704, 4
          %s715 = int_to_ptr.vmem [resolvable:$true] %s714
          %720 = dma.vmem_to_hbm [thread:$0]  %s715, 4096, %s713, %s701, 128, 128, 8
        $region56: #{tpu_custom_call.1} parent=35 // pred_fallthru
          _
        // Predicated region
        $region57: #{tpu_custom_call.1} parent=35 // pred_check
          %p721 = pneg %p153
        $region58: #{tpu_custom_call.1} parent=35 // pred_check_branch
          %723 = sbr.rel (%p721) target = $region60
        $region59: #{tpu_custom_call.1} parent=35 // pred_region
          %s725 = ssub.s32 32, 32
          %726 = vsyncadd [#allocation9], %s725
          %s728 = sshll.u32 [#allocation8], 4
          %s729 = int_to_ptr.vmem [resolvable:$true] %s728
          %731 = dma.vmem_to_hbm [thread:$0]  %s729, 32, %s5, [#allocation9]
        $region60: #{tpu_custom_call.1} parent=35 // pred_fallthru
          _
        // Predicated region
        $region61: #{tpu_custom_call.1} parent=35 // pred_check
          %p732 = pneg %p153
        $region62: #{tpu_custom_call.1} parent=35 // pred_check_branch
          %734 = sbr.rel (%p732) target = $region64
        $region63: #{tpu_custom_call.1} parent=35 // pred_region
          %735 = dma.done [#allocation9], 32
        $region64: #{tpu_custom_call.1} parent=35 // pred_fallthru
          _
      $region36: #{tpu_custom_call.1} parent=5 // pred_fallthru
        _
      %p736 = scmp.le.s32.totalorder 2, %s20
      // Predicated region
      $region65: #{tpu_custom_call.1} parent=5 // pred_check
        %p737 = pneg %p736
      $region66: #{tpu_custom_call.1} parent=5 // pred_check_branch
        %739 = sbr.rel (%p737) target = $region68
      $region67: #{tpu_custom_call.1} parent=5 // pred_region
        %s740 = ssub.s32 %s20, 2
        // Predicated region
        $region69: #{tpu_custom_call.1} parent=67 // pred_check
          %p741 = pneg %p138
        $region70: #{tpu_custom_call.1} parent=67 // pred_check_branch
          %743 = sbr.rel (%p741) target = $region72
        $region71: #{tpu_custom_call.1} parent=67 // pred_region
          %s744 = sand.u32 %s123, 1
          %s745 = scalar_lea.sflag [#allocation4], %s744
          %s746 = sand.u32 %s123, 1
          %s747 = smul.addr %s746, 256
          %s748 = scalar_lea.vmem [#allocation7], %s747
          %749 = dma.done %s745, 4096
        $region72: #{tpu_custom_call.1} parent=67 // pred_fallthru
          _
      $region68: #{tpu_custom_call.1} parent=5 // pred_fallthru
        _
    $region6: #{tpu_custom_call.1} parent=1 // loop_footer
      %s24 = sadd.s32 1, %s20
    $region7: #{tpu_custom_call.1} parent=1 // loop_footer_branch
      %19 = sbr.rel target = $region3
    $region8: #{tpu_custom_call.1} parent=1 // loop_exit
      _
    %750 = vsyncpa [#allocation3], 1
    %s751 = scalar_lea.sflag [#allocation3], 1
    %752 = vsyncpa %s751, 1
    %753 = vsyncpa [#allocation6], 1
    %754 = vsyncpa [#allocation4], 1
    %s755 = scalar_lea.sflag [#allocation4], 1
    %756 = vsyncpa %s755, 1
    %757 = vsyncpa [#allocation9], 1

</llo_original>
